<compile_context>
chip_gen: v7x
topology: tpu7x:2x2x1
jax: 0.10.0
libtpu: 0.0.40
codegen_flags: <defaults>
</compile_context>

<pallas_src>
import jax
import jax.numpy as jnp
from jax import lax
from jax.experimental import pallas as pl
from jax.experimental.pallas import tpu as pltpu


def _logreg_kernel(x_ref, w_ref, b_ref, o_ref):
    # x_ref : (TB, num_mols)  VMEM  -- batch tile, features on lane axis
    # w_ref : (2, num_mols)   VMEM  -- PyTorch Linear layout, grid-resident
    # b_ref : (2, 1)          VMEM
    # o_ref : (2, TB)         VMEM  -- lane-dense output (batch on lane axis)
    # Contract feature axes of weight and x directly -> (2, TB); no transpose.
    # (For tiny num_mols the MXU is mostly idle anyway; the kernel is HBM-bound
    #  on streaming x, so the matmul choice is not on the critical path.)
    acc = lax.dot_general(
        w_ref[...],
        x_ref[...],
        dimension_numbers=(((1,), (1,)), ((), ())),
        preferred_element_type=jnp.float32,
    )
    o_ref[...] = acc + b_ref[...]


def _round_up(n, m):
    return ((n + m - 1) // m) * m


def logreg_forward(x, weight, bias, *, max_tb=512):
    """Pallas equivalent of nn.Linear(num_mols, 2)(x).squeeze().

    x:      (B, num_mols) float32
    weight: (2, num_mols) float32   (PyTorch Linear layout, used as-is)
    bias:   (2,)          float32
    """
    B, num_mols = x.shape
    assert weight.shape == (2, num_mols)
    assert bias.shape == (2,)

    # --- choose batch tile TB -------------------------------------------------
    # Keep the double-buffered x tile within ~6 MiB so the smallest default
    # scoped-VMEM budget (16 MiB on v5e) always has headroom.
    bytes_per_row = num_mols * 4  # f32
    budget = 6 * 1024 * 1024
    tb_cap = max(8, budget // (2 * bytes_per_row))

    b8 = _round_up(B, 8)
    if b8 <= min(max_tb, tb_cap):
        TB = b8  # single tile covers the whole (8-padded) batch
    else:
        # multi-tile: TB must be a multiple of 128 so the (2, TB) lane-dense
        # output block satisfies the (8, 128) tiling constraint
        TB = max(128, (min(max_tb, tb_cap) // 128) * 128)

    # --- pad batch to a multiple of TB (padded rows trimmed after the call) ---
    B_pad = _round_up(B, TB)
    if B_pad != B:
        x = jnp.pad(x, ((0, B_pad - B), (0, 0)))

    grid = (B_pad // TB,)
    b2d = bias.reshape(2, 1)

    # Only raise the scoped-VMEM limit when the estimate actually needs it
    # (keeps headroom on v7x's 64 MiB physical VMEM).
    est_vmem = 2 * TB * num_mols * 4 + 2 * 2 * num_mols * 4 + 2 * 2 * TB * 4
    params = {"dimension_semantics": ("parallel",)}  # v7x: shard batch over 2 TCs
    if est_vmem > 12 * 1024 * 1024:
        params["vmem_limit_bytes"] = min(est_vmem + (4 << 20), 48 << 20)

    out_t = pl.pallas_call(
        _logreg_kernel,
        out_shape=jax.ShapeDtypeStruct((2, B_pad), jnp.float32),
        grid_spec=pltpu.PrefetchScalarGridSpec(
            num_scalar_prefetch=0,
            grid=grid,
            in_specs=[
                pl.BlockSpec((TB, num_mols), lambda i: (i, 0)),   # streamed
                pl.BlockSpec((2, num_mols), lambda i: (0, 0)),    # resident
                pl.BlockSpec((2, 1), lambda i: (0, 0)),           # resident
            ],
            out_specs=pl.BlockSpec((2, TB), lambda i: (0, i)),    # lane-dense
        ),
        compiler_params=pltpu.CompilerParams(**params),
    )(x, weight, b2d)

    out = out_t.T[:B]          # (B, 2); trim padding; tiny transpose in wrapper
    return jnp.squeeze(out)    # torch .squeeze(): no-op for B > 1, drops B == 1


if __name__ == "__main__":
    num_mols = 32
    key = jax.random.PRNGKey(0)
    kx, kw, kb, kx2, kx3 = jax.random.split(key, 5)

    bound = 1.0 / jnp.sqrt(num_mols)
    weight = jax.random.uniform(kw, (2, num_mols), jnp.float32, -bound, bound)
    bias = jax.random.uniform(kb, (2,), jnp.float32, -bound, bound)

    # Case 1: small batch (B=8), single tile.
    B = 8
    x = jax.random.normal(kx, (B, num_mols), dtype=jnp.float32)
    out = jax.block_until_ready(logreg_forward(x, weight, bias))
    ref = jnp.squeeze(x @ weight.T + bias)
    assert out.shape == ref.shape == (B, 2)
    assert jnp.allclose(out, ref, atol=1e-5, rtol=1e-5)

    # Case 2: ragged batch (B=20 -> padded to 24), exercises pad + trim.
    B2 = 20
    x2 = jax.random.normal(kx2, (B2, num_mols), dtype=jnp.float32)
    out2 = jax.block_until_ready(logreg_forward(x2, weight, bias))
    ref2 = jnp.squeeze(x2 @ weight.T + bias)
    assert out2.shape == ref2.shape == (B2, 2)
    assert jnp.allclose(out2, ref2, atol=1e-5, rtol=1e-5)

    # Case 3: batch > tile (force TB=128 -> grid of 3), exercises the pipelined
    # multi-tile path with a parallel batch axis.
    B3 = 300
    x3 = jax.random.normal(kx3, (B3, num_mols), dtype=jnp.float32)
    out3 = jax.block_until_ready(logreg_forward(x3, weight, bias, max_tb=128))
    ref3 = jnp.squeeze(x3 @ weight.T + bias)
    assert out3.shape == ref3.shape == (B3, 2)
    assert jnp.allclose(out3, ref3, atol=1e-5, rtol=1e-5)

    print("KERNEL_OK")
</pallas_src>

<mosaic_0001>
module attributes {stable_mosaic.version = 11 : i64} {
  func.func @_logreg_kernel(%arg0: i32, %arg1: memref<8x32xf32, #tpu.memory_space<vmem>>, %arg2: memref<2x32xf32, #tpu.memory_space<vmem>>, %arg3: memref<2x1xf32, #tpu.memory_space<vmem>>, %arg4: memref<2x8xf32, #tpu.memory_space<vmem>>) attributes {dimension_semantics = [#tpu.dimension_semantics<parallel>], iteration_bounds = array<i64: 1>, scalar_prefetch = 0 : i64, scratch_operands = 0 : i64, tpu.core_type = #tpu.core_type<tc>, window_params = [{transform_indices = @transform_0, window_bounds = array<i64: 8, 32>}, {pipeline_mode = #tpu.pipeline_mode<synchronous>, transform_indices = @transform_1, window_bounds = array<i64: 2, 32>}, {pipeline_mode = #tpu.pipeline_mode<synchronous>, transform_indices = @transform_2, window_bounds = array<i64: 2, 1>}, {transform_indices = @transform_3, window_bounds = array<i64: 2, 8>}]} {
    %c0 = arith.constant 0 : index
    %c0_0 = arith.constant 0 : index
    %0 = vector.load %arg2[%c0, %c0_0] : memref<2x32xf32, #tpu.memory_space<vmem>>, vector<2x32xf32>
    %c0_1 = arith.constant 0 : index
    %c0_2 = arith.constant 0 : index
    %1 = vector.load %arg1[%c0_1, %c0_2] : memref<8x32xf32, #tpu.memory_space<vmem>>, vector<8x32xf32>
    %cst = arith.constant dense<0.000000e+00> : vector<2x8xf32>
    %2 = tpu.matmul %0, %1, %cst {dimension_numbers = #tpu.dot_dimension_numbers<[1], [1], [0], [0], [0, 0, 1, 0], [], []>} : vector<2x32xf32>, vector<8x32xf32>, vector<2x8xf32> -> vector<2x8xf32>
    %c0_3 = arith.constant 0 : index
    %c0_4 = arith.constant 0 : index
    %3 = vector.load %arg3[%c0_3, %c0_4] : memref<2x1xf32, #tpu.memory_space<vmem>>, vector<2x1xf32>
    %4 = vector.broadcast %3 : vector<2x1xf32> to vector<2x8xf32>
    %5 = arith.addf %2, %4 : vector<2x8xf32>
    %c0_5 = arith.constant 0 : index
    %c0_6 = arith.constant 0 : index
    %6 = vector.load %arg4[%c0_5, %c0_6] : memref<2x8xf32, #tpu.memory_space<vmem>>, vector<2x8xf32>
    tpu.vector_store %arg4[%c0_5, %c0_6], %5 {strides = array<i32>} : memref<2x8xf32, #tpu.memory_space<vmem>>, vector<2x8xf32>,
    return
  }
  func.func @transform_0(%arg0: i32) -> (i32, i32) {
    %c0_i32 = arith.constant 0 : i32
    %c0_i32_0 = arith.constant 0 : i32
    return %arg0, %c0_i32 : i32, i32
  }
  func.func @transform_1(%arg0: i32) -> (i32, i32) {
    %c0_i32 = arith.constant 0 : i32
    %c0_i32_0 = arith.constant 0 : i32
    %c0_i32_1 = arith.constant 0 : i32
    return %c0_i32, %c0_i32_0 : i32, i32
  }
  func.func @transform_2(%arg0: i32) -> (i32, i32) {
    %c0_i32 = arith.constant 0 : i32
    %c0_i32_0 = arith.constant 0 : i32
    %c0_i32_1 = arith.constant 0 : i32
    return %c0_i32, %c0_i32_0 : i32, i32
  }
  func.func @transform_3(%arg0: i32) -> (i32, i32) {
    %c0_i32 = arith.constant 0 : i32
    %c0_i32_0 = arith.constant 0 : i32
    return %c0_i32, %arg0 : i32, i32
  }
}

</mosaic_0001>

<llo_original>
// kernel: tpu_custom_call.1
$region0: #{tpu_custom_call.1}
  #allocation0 [shape = 'u32[]', space=smem, size = 0x4, offset = 0x4, fixed_abs, tag = 'smem constant byte address 0x4 - core index']
  #allocation1 [shape = 'u32[144,128]{1,0:T(1,128)}', space=vmem, size = 0x12000, scoped, tag = 'internal scratch']
  %s0 = inlined_call_operand.hbm [shape: f32[8,32], index: 0, kind: input, shape index: {}]
  %s1 = inlined_call_operand.vmem [shape: f32[2,32], index: 1, kind: input, shape index: {}]
  %s2 = inlined_call_operand.vmem [shape: f32[2,1], index: 2, kind: input, shape index: {}]
  %s3 = inlined_call_operand.hbm [shape: f32[2,8], index: 3, kind: output, shape index: {}]
  %s4 = sld [smem:[#allocation0]]
  $region26: #{tpu_custom_call.1} parent=0
    _
  %s6 = ssub.s32 1, %s4
  %s7 = scalar_select 0, %s6, %s4
  $region1: #{tpu_custom_call.1} parent=0
    #allocation2 [shape = 'u8[4096]{0}', space=vmem, size = 0x1000, scoped, tag = 'input window, operand 0, single buffered']
    #allocation3 [shape = 's32[1]{0}', space=sflag, size = 0x4, scoped, tag = 'scoped memory for tpu_custom_call.1']
    #allocation4 [shape = 's32[1]{0}', space=sflag, size = 0x4, scoped, tag = 'scoped memory for tpu_custom_call.1']
    #allocation5 [shape = 'u8[1024]{0}', space=vmem, size = 0x400, scoped, tag = 'output window, operand 0, single buffered']
    %8 = vsyncpa [#allocation3], 0
    %9 = vsyncpa [#allocation4], 0
    // Predicated region
    $region2: #{tpu_custom_call.1} parent=1 // pred_check
      _
    $region3: #{tpu_custom_call.1} parent=1 // pred_check_branch
      %11 = sbr.rel (0) target = $region5
    $region4: #{tpu_custom_call.1} parent=1 // pred_region
      %s13 = ssub.s32 128, 128
      %14 = vsyncadd [#allocation3], %s13
      %s16 = sshll.u32 [#allocation2], 4
      %s17 = int_to_ptr.vmem [resolvable:$true] %s16
      %19 = dma.hbm_to_vmem [thread:$0]  %s0, 128, %s17, [#allocation3]
    $region5: #{tpu_custom_call.1} parent=1 // pred_fallthru
      _
    // Predicated region
    $region6: #{tpu_custom_call.1} parent=1 // pred_check
      _
    $region7: #{tpu_custom_call.1} parent=1 // pred_check_branch
      %21 = sbr.rel (0) target = $region9
    $region8: #{tpu_custom_call.1} parent=1 // pred_region
      _
    $region9: #{tpu_custom_call.1} parent=1 // pred_fallthru
      _
    // Predicated region
    $region10: #{tpu_custom_call.1} parent=1 // pred_check
      _
    $region11: #{tpu_custom_call.1} parent=1 // pred_check_branch
      %23 = sbr.rel (0) target = $region13
    $region12: #{tpu_custom_call.1} parent=1 // pred_region
      _
    $region13: #{tpu_custom_call.1} parent=1 // pred_fallthru
      _
    // Predicated region
    $region14: #{tpu_custom_call.1} parent=1 // pred_check
      _
    $region15: #{tpu_custom_call.1} parent=1 // pred_check_branch
      %25 = sbr.rel (0) target = $region17
    $region16: #{tpu_custom_call.1} parent=1 // pred_region
      %26 = dma.done [#allocation3], 128
    $region17: #{tpu_custom_call.1} parent=1 // pred_fallthru
      _
    %v27 = vld [vmem:[%s1] sm:$0x3]
    %v28 = vld [vmem:[#allocation2] sm:$0xff]
    %v29 = vld [vmem:[%s2] sm:$0x3]
    %31 = vset.pattern.permute.xlu0 0
    %32 = vperm.xlu0 %31, %v29
    %v33 = vpop.permute.xlu0 %32
    %vm35 = vcmask 261120
    %v37 = vsel %vm35, %v27, 0
    %v40 = vsel %vm35, %v28, 0
    %42 = vmatprep.subr.mxu0 0.0
    %43 = vmatpush1.xpose.msra.mxu0 %v40
    %44 = vmatprep.subr.mxu0 0.0
    %45 = vmatpush1.xpose.msra.mxu0 0.0
    %46 = vmatprep.subr.mxu0 0.0
    %47 = vmatpush1.xpose.msra.mxu0 0.0
    %48 = vmatprep.subr.mxu0 0.0
    %49 = vmatpush1.xpose.msra.mxu0 0.0
    %50 = vmatprep.subr.mxu0 0.0
    %51 = vmatpush1.xpose.msra.mxu0 0.0
    %52 = vmatprep.subr.mxu0 0.0
    %53 = vmatpush1.xpose.msra.mxu0 0.0
    %54 = vmatprep.subr.mxu0 0.0
    %55 = vmatpush1.xpose.msra.mxu0 0.0
    %56 = vmatprep.subr.mxu0 0.0
    %57 = vmatpush1.xpose.msra.mxu0 0.0
    %58 = vmatprep.subr.mxu0 0.0
    %59 = vmatpush1.xpose.msra.mxu0 0.0
    %60 = vmatprep.subr.mxu0 0.0
    %61 = vmatpush1.xpose.msra.mxu0 0.0
    %62 = vmatprep.subr.mxu0 0.0
    %63 = vmatpush1.xpose.msra.mxu0 0.0
    %64 = vmatprep.subr.mxu0 0.0
    %65 = vmatpush1.xpose.msra.mxu0 0.0
    %66 = vmatprep.subr.mxu0 0.0
    %67 = vmatpush1.xpose.msra.mxu0 0.0
    %68 = vmatprep.subr.mxu0 0.0
    %69 = vmatpush1.xpose.msra.mxu0 0.0
    %70 = vmatprep.subr.mxu0 0.0
    %71 = vmatpush1.xpose.msra.mxu0 0.0
    %72 = vmatprep.subr.mxu0 0.0
    %73 = vmatpush1.xpose.msra.mxu0 0.0
    %74 = vmatprep.subr.mxu0 0.0
    %75 = vmatpush1.xpose.msra.mxu0 0.0
    %76 = vmatprep.subr.mxu0 0.0
    %77 = vmatpush1.xpose.msra.mxu0 0.0
    %78 = vmatprep.subr.mxu0 0.0
    %79 = vmatpush1.xpose.msra.mxu0 0.0
    %80 = vmatprep.subr.mxu0 0.0
    %81 = vmatpush1.xpose.msra.mxu0 0.0
    %82 = vmatprep.subr.mxu0 0.0
    %83 = vmatpush1.xpose.msra.mxu0 0.0
    %84 = vmatprep.subr.mxu0 0.0
    %85 = vmatpush1.xpose.msra.mxu0 0.0
    %86 = vmatprep.subr.mxu0 0.0
    %87 = vmatpush1.xpose.msra.mxu0 0.0
    %88 = vmatprep.subr.mxu0 0.0
    %89 = vmatpush1.xpose.msra.mxu0 0.0
    %90 = vmatprep.subr.mxu0 0.0
    %91 = vmatpush1.xpose.msra.mxu0 0.0
    %92 = vmatprep.subr.mxu0 0.0
    %93 = vmatpush1.xpose.msra.mxu0 0.0
    %94 = vmatprep.subr.mxu0 0.0
    %95 = vmatpush1.xpose.msra.mxu0 0.0
    %96 = vmatprep.subr.mxu0 0.0
    %97 = vmatpush1.xpose.msra.mxu0 0.0
    %98 = vmatprep.subr.mxu0 0.0
    %99 = vmatpush1.xpose.msra.mxu0 0.0
    %100 = vmatprep.subr.mxu0 0.0
    %101 = vmatpush1.xpose.msra.mxu0 0.0
    %102 = vmatprep.subr.mxu0 0.0
    %103 = vmatpush1.xpose.msra.mxu0 0.0
    %104 = vmatprep.subr.mxu0 0.0
    %105 = vmatpush1.xpose.msra.mxu0 0.0
    %106 = vmatprep.mubr.f32.mxu0 0.0
    %107 = vmatmul.mubr.f32.gmra.mrb[0].mxu0 %v37
    %v108 = vpop.f32.mrb[0].mxu0
    %v109 = vadd.f32 %v33, %v108
    %v110 = vpop.f32.mrb[0].mxu0
    %111 = vdwg.mxu0
    %vm112 = vcmask 58368
    %113 = vst.msk [vmem:[#allocation5] sm:$0x3] %vm112, %v109
    // Predicated region
    $region18: #{tpu_custom_call.1} parent=1 // pred_check
      _
    $region19: #{tpu_custom_call.1} parent=1 // pred_check_branch
      %115 = sbr.rel (0) target = $region21
    $region20: #{tpu_custom_call.1} parent=1 // pred_region
      %s117 = ssub.s32 32, 32
      %118 = vsyncadd [#allocation4], %s117
      %s120 = sshll.u32 [#allocation5], 4
      %s121 = int_to_ptr.vmem [resolvable:$true] %s120
      %123 = dma.vmem_to_hbm [thread:$0]  %s121, 32, %s3, [#allocation4]
    $region21: #{tpu_custom_call.1} parent=1 // pred_fallthru
      _
    // Predicated region
    $region22: #{tpu_custom_call.1} parent=1 // pred_check
      _
    $region23: #{tpu_custom_call.1} parent=1 // pred_check_branch
      %125 = sbr.rel (0) target = $region25
    $region24: #{tpu_custom_call.1} parent=1 // pred_region
      %126 = dma.done [#allocation4], 32
    $region25: #{tpu_custom_call.1} parent=1 // pred_fallthru
      _
    %127 = vsyncpa [#allocation3], 1
    %128 = vsyncpa [#allocation4], 1

</llo_original>
